<compile_context>
chip_gen: v7x
topology: tpu7x:2x2x1
jax: 0.10.0
libtpu: 0.0.40
codegen_flags: <defaults>
</compile_context>

<pallas_src>
import jax
import jax.numpy as jnp
from jax.experimental import pallas as pl
from jax.experimental.pallas import tpu as pltpu


# ---------------------------------------------------------------------------
# Fused kernel, per block of TB images:
#   perturbed = x01 * (2a) + (eps * s - a)                       (TB, C, HW)
#   h         = relu( W1t @ perturbed + (b1 + temb[t]) )         (TB, hid, HW)
#   pred_eps  = W2t @ h + b2                                     (TB, C, HW)
# ---------------------------------------------------------------------------
def _fused_kernel(x_ref, eps_ref, sc_ref, bias1_ref, w1t_ref, w2t_ref, b2_ref,
                  pert_ref, pred_ref):
    i = pl.program_id(0)
    tb = x_ref.shape[0]

    # Per-image schedule scalars, one lane-dense VMEM block: [2a, s, -a, 0].
    sc = sc_ref[...]                       # (TB, 1, 4) f32
    a2 = sc[:, :, 0:1]                     # 2 * sqrt(alpha_bar[t])
    s = sc[:, :, 1:2]                      # sqrt(1 - alpha_bar[t])
    na = sc[:, :, 2:3]                     # -sqrt(alpha_bar[t])

    x01 = x_ref[...].astype(jnp.float32)   # (TB, C, HW), HW lane-dense (k*128)
    eps = eps_ref[...].astype(jnp.float32)

    # scale_to_minus_one_to_one + q(x_t|x_0), rescale folded into the scalars:
    # (2x-1)*a + eps*s == x*(2a) + (eps*s - a).  All f32.
    perturbed = x01 * a2 + (eps * s + na)
    pert_ref[...] = perturbed.astype(pert_ref.dtype)

    # Stand-in noise-prediction model, batched over the whole TB block.
    # bf16 operands for the MXU, f32 accumulation (preferred_element_type).
    p_bf = perturbed.astype(jnp.bfloat16)
    h = jnp.einsum("bhc,bcs->bhs", w1t_ref[...], p_bf,
                   preferred_element_type=jnp.float32)        # (TB, hid, HW) f32

    # Resident per-image bias table (b1 + temb[t]); slice this block's TB rows.
    start = pl.multiple_of(i * tb, tb)
    bias1 = bias1_ref[pl.ds(start, tb), :, :]                  # (TB, hid, 1) f32
    h = jnp.maximum(h + bias1, 0.0)

    y = jnp.einsum("bch,bhs->bcs", w2t_ref[...], h.astype(jnp.bfloat16),
                   preferred_element_type=jnp.float32)         # (TB, C, HW) f32
    y = y + b2_ref[...]                                        # (1, C, 1) f32
    pred_ref[...] = y.astype(pred_ref.dtype)


def _pick_tb(batch, bytes_per_image, target_block_bytes=2 << 20):
    """Largest divisor of `batch` such that a block stream is <= ~2 MiB and at
    least 2 grid steps remain (keeps both v7x TensorCores busy)."""
    if batch <= 1:
        return 1
    cap = min(batch // 2, max(1, target_block_bytes // max(bytes_per_image, 1)))
    cap = max(cap, 1)
    tb = 1
    for d in range(1, cap + 1):
        if batch % d == 0:
            tb = d
    return tb


def diffusion_forward_pallas(x01_nchw, eps_nchw, sab, somab, temb_b, params):
    """x01_nchw in [0,1], eps ~ N(0,I); returns (perturbed, pred_epsilon), NCHW."""
    B, C, H, W = x01_nchw.shape
    HW = H * W
    hid = params["w1t"].shape[0]
    dt = x01_nchw.dtype
    itemsize = jnp.dtype(dt).itemsize

    tb = _pick_tb(B, C * HW * itemsize)
    n_blocks = B // tb

    # Free reshapes to the lane-dense channels-major layout (HW = k*128 lanes).
    x_b = x01_nchw.reshape(B, C, HW)
    e_b = eps_nchw.reshape(B, C, HW)

    # Per-image schedule scalars folded into one lane-dense slab: [2a, s, -a, 0].
    sab32 = sab.astype(jnp.float32)
    somab32 = somab.astype(jnp.float32)
    sc = jnp.stack([2.0 * sab32, somab32, -sab32, jnp.zeros_like(sab32)],
                   axis=-1)[:, None, :]                          # (B, 1, 4)

    # Per-image bias table (b1 + temb[t]) — resident in VMEM, sliced in-kernel.
    bias1 = (params["b1"][None, :] + temb_b).astype(jnp.float32)[:, :, None]  # (B,hid,1)
    b2 = params["b2"].astype(jnp.float32)[None, :, None]                       # (1,C,1)

    # Weights pre-cast to bf16 and pre-broadcast to the block batch (tiny,
    # resident), so each grid step is one batched MXU push with no staging work.
    w1t_b = jnp.broadcast_to(params["w1t"].astype(jnp.bfloat16)[None], (tb, hid, C))
    w2t_b = jnp.broadcast_to(params["w2t"].astype(jnp.bfloat16)[None], (tb, C, hid))

    cost = pl.CostEstimate(
        flops=int(4 * B * hid * C * HW + 5 * B * C * HW + 2 * B * hid * HW),
        transcendentals=0,
        bytes_accessed=int(4 * B * C * HW * itemsize        # x, eps, pert, pred
                           + B * (4 + hid) * 4              # scalars + bias table
                           + 2 * tb * hid * C * 2 + C * 4), # weights + b2
    )

    pert, pred = pl.pallas_call(
        _fused_kernel,
        out_shape=(jax.ShapeDtypeStruct((B, C, HW), dt),
                   jax.ShapeDtypeStruct((B, C, HW), dt)),
        grid=(n_blocks,),
        in_specs=[
            pl.BlockSpec((tb, C, HW), lambda i: (i, 0, 0)),     # x01 block
            pl.BlockSpec((tb, C, HW), lambda i: (i, 0, 0)),     # eps block
            pl.BlockSpec((tb, 1, 4), lambda i: (i, 0, 0)),      # [2a, s, -a, 0]
            pl.BlockSpec((B, hid, 1), lambda i: (0, 0, 0)),     # bias table (resident)
            pl.BlockSpec((tb, hid, C), lambda i: (0, 0, 0)),    # W1t (resident)
            pl.BlockSpec((tb, C, hid), lambda i: (0, 0, 0)),    # W2t (resident)
            pl.BlockSpec((1, C, 1), lambda i: (0, 0, 0)),       # b2 (resident)
        ],
        out_specs=(
            pl.BlockSpec((tb, C, HW), lambda i: (i, 0, 0)),     # perturbed
            pl.BlockSpec((tb, C, HW), lambda i: (i, 0, 0)),     # pred_epsilon
        ),
        compiler_params=pltpu.CompilerParams(
            dimension_semantics=("parallel",)),
        cost_estimate=cost,
    )(x_b, e_b, sc, bias1, w1t_b, w2t_b, b2)

    return pert.reshape(B, C, H, W), pred.reshape(B, C, H, W)


# ---------------------------------------------------------------------------
# Glue: Diffusion module (schedules, sampling of t / epsilon, reshapes)
# ---------------------------------------------------------------------------
def init_model_params(key, C, hidden, n_times):
    k1, k2, k3 = jax.random.split(key, 3)
    return {
        "temb_table": 0.02 * jax.random.normal(k1, (n_times, hidden), jnp.float32),
        # Stored pre-transposed for the channels-major kernel layout.
        "w1t": jax.random.normal(k2, (hidden, C), jnp.float32) / jnp.sqrt(C),
        "b1": jnp.zeros((hidden,), jnp.float32),
        "w2t": jax.random.normal(k3, (C, hidden), jnp.float32) / jnp.sqrt(hidden),
        "b2": jnp.zeros((C,), jnp.float32),
    }


class Diffusion:
    def __init__(self, params, image_resolution=(16, 16, 4), n_times=1000,
                 beta_minmax=(1e-4, 0.02)):
        self.img_H, self.img_W, self.img_C = image_resolution
        self.n_times = n_times
        self.params = params
        betas = jnp.linspace(beta_minmax[0], beta_minmax[1], n_times,
                             dtype=jnp.float32)
        self.sqrt_betas = jnp.sqrt(betas)
        self.alphas = 1.0 - betas
        self.sqrt_alphas = jnp.sqrt(self.alphas)
        alpha_bars = jnp.cumprod(self.alphas)
        self.sqrt_one_minus_alpha_bars = jnp.sqrt(1.0 - alpha_bars)
        self.sqrt_alpha_bars = jnp.sqrt(alpha_bars)

    def forward(self, x_zeros, key):
        B, C, H, W = x_zeros.shape
        k_t, k_eps = jax.random.split(key)
        # t ~ randint(0, n_times, (B,)); epsilon ~ N(0, I)  (JAX RNG stand-ins
        # for torch.randint / torch.randn_like)
        t = jax.random.randint(k_t, (B,), 0, self.n_times)
        epsilon = jax.random.normal(k_eps, x_zeros.shape, dtype=x_zeros.dtype)

        # extract(): per-batch gather of schedule scalars / time embedding (glue)
        sab = self.sqrt_alpha_bars[t]                 # (B,)
        somab = self.sqrt_one_minus_alpha_bars[t]     # (B,)
        temb_b = self.params["temb_table"][t]         # (B, hidden)

        # Hot path: fused noising + noise-prediction model in one Pallas call.
        perturbed, pred_epsilon = diffusion_forward_pallas(
            x_zeros, epsilon, sab, somab, temb_b, self.params)

        return perturbed, epsilon, pred_epsilon


def _reference_forward(x01, eps, sab, somab, temb_b, params):
    """Pure-JAX reference with the same folded arithmetic / bf16 matmul dtypes."""
    B, C, H, W = x01.shape
    sab_b = sab[:, None, None, None]
    somab_b = somab[:, None, None, None]
    pert = x01 * (2.0 * sab_b) + (eps * somab_b + (-sab_b))
    x_b = pert.reshape(B, C, H * W)
    w1t = params["w1t"].astype(jnp.bfloat16)
    w2t = params["w2t"].astype(jnp.bfloat16)
    h = jnp.einsum("hc,bcs->bhs", w1t, x_b.astype(jnp.bfloat16),
                   preferred_element_type=jnp.float32)
    h = jnp.maximum(h + (params["b1"][None, :] + temb_b)[:, :, None], 0.0)
    y = jnp.einsum("ch,bhs->bcs", w2t, h.astype(jnp.bfloat16),
                   preferred_element_type=jnp.float32) + params["b2"][None, :, None]
    return pert, y.reshape(B, C, H, W)


if __name__ == "__main__":
    key = jax.random.PRNGKey(0)
    k_x, k_params, k_fwd = jax.random.split(key, 3)

    B, C, H, W = 2, 4, 16, 16
    hidden = 32
    n_times = 1000

    # images in [0, 1] like MNIST pixels fed to the diffusion wrapper
    x = jax.random.uniform(k_x, (B, C, H, W), dtype=jnp.float32)

    params = init_model_params(k_params, C, hidden, n_times)
    diffusion = Diffusion(params, image_resolution=(H, W, C), n_times=n_times)

    perturbed, epsilon, pred_epsilon = diffusion.forward(x, k_fwd)
    jax.block_until_ready((perturbed, epsilon, pred_epsilon))

    assert perturbed.shape == (B, C, H, W)
    assert epsilon.shape == (B, C, H, W)
    assert pred_epsilon.shape == (B, C, H, W)
    assert jnp.all(jnp.isfinite(perturbed))
    assert jnp.all(jnp.isfinite(pred_epsilon))

    # Re-derive the same t used inside forward() for the reference check.
    k_t, _ = jax.random.split(k_fwd)
    t = jax.random.randint(k_t, (B,), 0, n_times)
    sab = diffusion.sqrt_alpha_bars[t]
    somab = diffusion.sqrt_one_minus_alpha_bars[t]
    temb_b = params["temb_table"][t]

    # perturbed against the canonical (2x-1)*a + eps*s formula (pure f32).
    pert_canon = ((x * 2.0 - 1.0) * sab[:, None, None, None]
                  + epsilon * somab[:, None, None, None])
    assert jnp.allclose(perturbed, pert_canon, atol=1e-5, rtol=1e-5)

    # Full reference with matching folded math + bf16 matmul operands.
    pert_ref, pred_ref = _reference_forward(x, epsilon, sab, somab, temb_b, params)
    assert jnp.allclose(perturbed, pert_ref, atol=1e-6, rtol=1e-6)
    assert jnp.allclose(pred_epsilon, pred_ref, atol=2e-3, rtol=2e-3)

    print("KERNEL_OK")
</pallas_src>

<mosaic_0001>
module attributes {stable_mosaic.version = 11 : i64} {
  func.func @_fused_kernel(%arg0: i32, %arg1: memref<1x4x256xf32, #tpu.memory_space<vmem>>, %arg2: memref<1x4x256xf32, #tpu.memory_space<vmem>>, %arg3: memref<1x1x4xf32, #tpu.memory_space<vmem>>, %arg4: memref<2x32x1xf32, #tpu.memory_space<vmem>>, %arg5: memref<1x32x4xbf16, #tpu.memory_space<vmem>>, %arg6: memref<1x4x32xbf16, #tpu.memory_space<vmem>>, %arg7: memref<1x4x1xf32, #tpu.memory_space<vmem>>, %arg8: memref<1x4x256xf32, #tpu.memory_space<vmem>>, %arg9: memref<1x4x256xf32, #tpu.memory_space<vmem>>) attributes {dimension_semantics = [#tpu.dimension_semantics<parallel>], iteration_bounds = array<i64: 2>, scalar_prefetch = 0 : i64, scratch_operands = 0 : i64, tpu.core_type = #tpu.core_type<tc>, window_params = [{transform_indices = @transform_0, window_bounds = array<i64: 1, 4, 256>}, {transform_indices = @transform_1, window_bounds = array<i64: 1, 4, 256>}, {transform_indices = @transform_2, window_bounds = array<i64: 1, 1, 4>}, {pipeline_mode = #tpu.pipeline_mode<synchronous>, transform_indices = @transform_3, window_bounds = array<i64: 2, 32, 1>}, {pipeline_mode = #tpu.pipeline_mode<synchronous>, transform_indices = @transform_4, window_bounds = array<i64: 1, 32, 4>}, {pipeline_mode = #tpu.pipeline_mode<synchronous>, transform_indices = @transform_5, window_bounds = array<i64: 1, 4, 32>}, {pipeline_mode = #tpu.pipeline_mode<synchronous>, transform_indices = @transform_6, window_bounds = array<i64: 1, 4, 1>}, {transform_indices = @transform_7, window_bounds = array<i64: 1, 4, 256>}, {transform_indices = @transform_8, window_bounds = array<i64: 1, 4, 256>}]} {
    %c0 = arith.constant 0 : index
    %c0_0 = arith.constant 0 : index
    %c0_1 = arith.constant 0 : index
    %0 = vector.load %arg3[%c0, %c0_0, %c0_1] : memref<1x1x4xf32, #tpu.memory_space<vmem>>, vector<1x1x4xf32>
    %1 = vector.extract_strided_slice %0 {offsets = [0, 0, 0], sizes = [1, 1, 1], strides = [1, 1, 1]} : vector<1x1x4xf32> to vector<1x1x1xf32>
    %2 = vector.extract_strided_slice %0 {offsets = [0, 0, 1], sizes = [1, 1, 1], strides = [1, 1, 1]} : vector<1x1x4xf32> to vector<1x1x1xf32>
    %3 = vector.extract_strided_slice %0 {offsets = [0, 0, 2], sizes = [1, 1, 1], strides = [1, 1, 1]} : vector<1x1x4xf32> to vector<1x1x1xf32>
    %c0_2 = arith.constant 0 : index
    %c0_3 = arith.constant 0 : index
    %c0_4 = arith.constant 0 : index
    %4 = vector.load %arg1[%c0_2, %c0_3, %c0_4] : memref<1x4x256xf32, #tpu.memory_space<vmem>>, vector<1x4x256xf32>
    %c0_5 = arith.constant 0 : index
    %c0_6 = arith.constant 0 : index
    %c0_7 = arith.constant 0 : index
    %5 = vector.load %arg2[%c0_5, %c0_6, %c0_7] : memref<1x4x256xf32, #tpu.memory_space<vmem>>, vector<1x4x256xf32>
    %6 = vector.broadcast %1 : vector<1x1x1xf32> to vector<1x4x256xf32>
    %7 = arith.mulf %4, %6 : vector<1x4x256xf32>
    %8 = vector.broadcast %2 : vector<1x1x1xf32> to vector<1x4x256xf32>
    %9 = arith.mulf %5, %8 : vector<1x4x256xf32>
    %10 = vector.broadcast %3 : vector<1x1x1xf32> to vector<1x4x256xf32>
    %11 = arith.addf %9, %10 : vector<1x4x256xf32>
    %12 = arith.addf %7, %11 : vector<1x4x256xf32>
    %c0_8 = arith.constant 0 : index
    %c0_9 = arith.constant 0 : index
    %c0_10 = arith.constant 0 : index
    %13 = vector.load %arg8[%c0_8, %c0_9, %c0_10] : memref<1x4x256xf32, #tpu.memory_space<vmem>>, vector<1x4x256xf32>
    tpu.vector_store %arg8[%c0_8, %c0_9, %c0_10], %12 {strides = array<i32>} : memref<1x4x256xf32, #tpu.memory_space<vmem>>, vector<1x4x256xf32>,
    %14 = arith.truncf %12 : vector<1x4x256xf32> to vector<1x4x256xbf16>
    %c0_11 = arith.constant 0 : index
    %c0_12 = arith.constant 0 : index
    %c0_13 = arith.constant 0 : index
    %15 = vector.load %arg5[%c0_11, %c0_12, %c0_13] : memref<1x32x4xbf16, #tpu.memory_space<vmem>>, vector<1x32x4xbf16>
    "tpu.trace_start"() <{level = 10 : i32, message = "bhc,bcs->bhs"}> : () -> ()
    %cst = arith.constant dense<0.000000e+00> : vector<1x32x256xf32>
    %16 = tpu.matmul %15, %14, %cst {dimension_numbers = #tpu.dot_dimension_numbers<[2], [1], [1], [2], [0, 0, 0, 1, 1, 2], [0], [0]>} : vector<1x32x4xbf16>, vector<1x4x256xbf16>, vector<1x32x256xf32> -> vector<1x32x256xf32>
    "tpu.trace_stop"() : () -> ()
    %c1_i32 = arith.constant 1 : i32
    %17 = arith.muli %arg0, %c1_i32 : i32
    %18 = tpu.assume_multiple %17, 1 : i32
    %19 = arith.index_cast %18 : i32 to index
    %c0_14 = arith.constant 0 : index
    %c0_15 = arith.constant 0 : index
    %20 = vector.load %arg4[%19, %c0_14, %c0_15] : memref<2x32x1xf32, #tpu.memory_space<vmem>>, vector<1x32x1xf32>
    %21 = vector.broadcast %20 : vector<1x32x1xf32> to vector<1x32x256xf32>
    %22 = arith.addf %16, %21 : vector<1x32x256xf32>
    %cst_16 = arith.constant 0.000000e+00 : f32
    %23 = vector.broadcast %cst_16 : f32 to vector<1x32x256xf32>
    %24 = arith.maximumf %22, %23 : vector<1x32x256xf32>
    %c0_17 = arith.constant 0 : index
    %c0_18 = arith.constant 0 : index
    %c0_19 = arith.constant 0 : index
    %25 = vector.load %arg6[%c0_17, %c0_18, %c0_19] : memref<1x4x32xbf16, #tpu.memory_space<vmem>>, vector<1x4x32xbf16>
    %26 = arith.truncf %24 : vector<1x32x256xf32> to vector<1x32x256xbf16>
    "tpu.trace_start"() <{level = 10 : i32, message = "bch,bhs->bcs"}> : () -> ()
    %cst_20 = arith.constant dense<0.000000e+00> : vector<1x4x256xf32>
    %27 = tpu.matmul %25, %26, %cst_20 {dimension_numbers = #tpu.dot_dimension_numbers<[2], [1], [1], [2], [0, 0, 0, 1, 1, 2], [0], [0]>} : vector<1x4x32xbf16>, vector<1x32x256xbf16>, vector<1x4x256xf32> -> vector<1x4x256xf32>
    "tpu.trace_stop"() : () -> ()
    %c0_21 = arith.constant 0 : index
    %c0_22 = arith.constant 0 : index
    %c0_23 = arith.constant 0 : index
    %28 = vector.load %arg7[%c0_21, %c0_22, %c0_23] : memref<1x4x1xf32, #tpu.memory_space<vmem>>, vector<1x4x1xf32>
    %29 = vector.broadcast %28 : vector<1x4x1xf32> to vector<1x4x256xf32>
    %30 = arith.addf %27, %29 : vector<1x4x256xf32>
    %c0_24 = arith.constant 0 : index
    %c0_25 = arith.constant 0 : index
    %c0_26 = arith.constant 0 : index
    %31 = vector.load %arg9[%c0_24, %c0_25, %c0_26] : memref<1x4x256xf32, #tpu.memory_space<vmem>>, vector<1x4x256xf32>
    tpu.vector_store %arg9[%c0_24, %c0_25, %c0_26], %30 {strides = array<i32>} : memref<1x4x256xf32, #tpu.memory_space<vmem>>, vector<1x4x256xf32>,
    return
  }
  func.func @transform_0(%arg0: i32) -> (i32, i32, i32) {
    %c0_i32 = arith.constant 0 : i32
    %c0_i32_0 = arith.constant 0 : i32
    %c0_i32_1 = arith.constant 0 : i32
    return %arg0, %c0_i32, %c0_i32_0 : i32, i32, i32
  }
  func.func @transform_1(%arg0: i32) -> (i32, i32, i32) {
    %c0_i32 = arith.constant 0 : i32
    %c0_i32_0 = arith.constant 0 : i32
    %c0_i32_1 = arith.constant 0 : i32
    return %arg0, %c0_i32, %c0_i32_0 : i32, i32, i32
  }
  func.func @transform_2(%arg0: i32) -> (i32, i32, i32) {
    %c0_i32 = arith.constant 0 : i32
    %c0_i32_0 = arith.constant 0 : i32
    %c0_i32_1 = arith.constant 0 : i32
    return %arg0, %c0_i32, %c0_i32_0 : i32, i32, i32
  }
  func.func @transform_3(%arg0: i32) -> (i32, i32, i32) {
    %c0_i32 = arith.constant 0 : i32
    %c0_i32_0 = arith.constant 0 : i32
    %c0_i32_1 = arith.constant 0 : i32
    %c0_i32_2 = arith.constant 0 : i32
    return %c0_i32, %c0_i32_0, %c0_i32_1 : i32, i32, i32
  }
  func.func @transform_4(%arg0: i32) -> (i32, i32, i32) {
    %c0_i32 = arith.constant 0 : i32
    %c0_i32_0 = arith.constant 0 : i32
    %c0_i32_1 = arith.constant 0 : i32
    %c0_i32_2 = arith.constant 0 : i32
    return %c0_i32, %c0_i32_0, %c0_i32_1 : i32, i32, i32
  }
  func.func @transform_5(%arg0: i32) -> (i32, i32, i32) {
    %c0_i32 = arith.constant 0 : i32
    %c0_i32_0 = arith.constant 0 : i32
    %c0_i32_1 = arith.constant 0 : i32
    %c0_i32_2 = arith.constant 0 : i32
    return %c0_i32, %c0_i32_0, %c0_i32_1 : i32, i32, i32
  }
  func.func @transform_6(%arg0: i32) -> (i32, i32, i32) {
    %c0_i32 = arith.constant 0 : i32
    %c0_i32_0 = arith.constant 0 : i32
    %c0_i32_1 = arith.constant 0 : i32
    %c0_i32_2 = arith.constant 0 : i32
    return %c0_i32, %c0_i32_0, %c0_i32_1 : i32, i32, i32
  }
  func.func @transform_7(%arg0: i32) -> (i32, i32, i32) {
    %c0_i32 = arith.constant 0 : i32
    %c0_i32_0 = arith.constant 0 : i32
    %c0_i32_1 = arith.constant 0 : i32
    return %arg0, %c0_i32, %c0_i32_0 : i32, i32, i32
  }
  func.func @transform_8(%arg0: i32) -> (i32, i32, i32) {
    %c0_i32 = arith.constant 0 : i32
    %c0_i32_0 = arith.constant 0 : i32
    %c0_i32_1 = arith.constant 0 : i32
    return %arg0, %c0_i32, %c0_i32_0 : i32, i32, i32
  }
}

</mosaic_0001>

<llo_original>
// kernel: tpu_custom_call.1
$region0: #{tpu_custom_call.1}
  #allocation0 [shape = 'u32[]', space=smem, size = 0x4, offset = 0x4, fixed_abs, tag = 'smem constant byte address 0x4 - core index']
  #allocation1 [shape = 'u32[144,128]{1,0:T(1,128)}', space=vmem, size = 0x12000, scoped, tag = 'internal scratch']
  %s0 = inlined_call_operand.vmem [shape: f32[2,4,256], index: 0, kind: input, shape index: {}]
  %s1 = inlined_call_operand.vmem [shape: f32[2,4,256], index: 1, kind: input, shape index: {}]
  %s2 = inlined_call_operand.vmem [shape: f32[2,1,4], index: 2, kind: input, shape index: {}]
  %s3 = inlined_call_operand.vmem [shape: f32[2,32,1], index: 3, kind: input, shape index: {}]
  %s4 = inlined_call_operand.vmem [shape: bf16[1,32,4], index: 4, kind: input, shape index: {}]
  %s5 = inlined_call_operand.vmem [shape: bf16[1,4,32], index: 5, kind: input, shape index: {}]
  %s6 = inlined_call_operand.vmem [shape: f32[1,4,1], index: 6, kind: input, shape index: {}]
  %s7 = inlined_call_operand.hbm [shape: f32[2,4,256], index: 7, kind: output, shape index: {0}]
  %s8 = inlined_call_operand.hbm [shape: f32[2,4,256], index: 8, kind: output, shape index: {1}]
  %9 = xla_tuple %s7, %s8
  %s10 = sld [smem:[#allocation0]]
  $region69: #{tpu_custom_call.1} parent=0
    _
  %s12 = ssub.s32 1, %s10
  %s13 = scalar_select 0, %s12, %s10
  $region1: #{tpu_custom_call.1} parent=0
    #allocation2 [shape = 'u8[8192]{0}', space=vmem, size = 0x2000, scoped, tag = 'output window, operand 0']
    #allocation3 [shape = 's32[2]{0}', space=sflag, size = 0x8, scoped, tag = 'scoped memory for tpu_custom_call.1']
    #allocation4 [shape = 'u8[8192]{0}', space=vmem, size = 0x2000, scoped, tag = 'output window, operand 1']
    #allocation5 [shape = 's32[2]{0}', space=sflag, size = 0x8, scoped, tag = 'scoped memory for tpu_custom_call.1']
    %14 = vsyncpa [#allocation3], 0
    %s15 = scalar_lea.sflag [#allocation3], 1
    %16 = vsyncpa %s15, 0
    %17 = vsyncpa [#allocation5], 0
    %s18 = scalar_lea.sflag [#allocation5], 1
    %19 = vsyncpa %s18, 0
    loop: start=0, step=1, limit=4
    $region2: #{tpu_custom_call.1} parent=1 // loop_pre_header
      _
    $region3: #{tpu_custom_call.1} parent=1 // loop_header
      %s21 = sphi 0, %s25
      %p22 = scmp.ge.s32.totalorder %s21, 4
      %s31 = sphi 0, %s33
      %s34 = sphi 0, %s31
      %s35 = sphi 0, %s34
      %s51 = sphi 0, %s35
      %s57 = sphi 0, %s59
      %s60 = sphi 0, %s57
      %s61 = sphi 0, %s60
      %s77 = sphi 0, %s61
      %s83 = sphi 0, %s85
      %s86 = sphi 0, %s83
      %s87 = sphi 0, %s86
      %s103 = sphi 0, %s87
      %s107 = sphi 0, %s107
      %s109 = sphi 0, %s107
      %s110 = sphi 0, %s109
      %s124 = sphi 0, %s110
      %s128 = sphi 0, %s128
      %s130 = sphi 0, %s128
      %s131 = sphi 0, %s130
      %s145 = sphi 0, %s131
      %s149 = sphi 0, %s149
      %s151 = sphi 0, %s149
      %s152 = sphi 0, %s151
      %s166 = sphi 0, %s152
      %s170 = sphi 0, %s170
      %s172 = sphi 0, %s170
      %s173 = sphi 0, %s172
      %s187 = sphi 0, %s173
      %s193 = sphi 0, %s195
      %s196 = sphi 0, %s193
      %s197 = sphi 0, %s196
      %s213 = sphi 0, %s197
      %s219 = sphi 0, %s221
      %s222 = sphi 0, %s219
      %s223 = sphi 0, %s222
      %s239 = sphi 0, %s223
    $region4: #{tpu_custom_call.1} parent=1 // loop_header_branch
      %24 = sbr.rel (%p22) target = $region8
    $region5: #{tpu_custom_call.1} parent=1 // loop_body
      %s26 = ssub.s32 %s21, 1
      %s27 = ssub.s32 %s21, 2
      %s28 = sadd.s32 %s21, 1
      %s29 = ssub.s32 %s21, %s28
      %p30 = scmp.eq.s32.totalorder %s29, 0
      %s32 = sadd.s32 %s31, 1
      %s33 = scalar_select %p30, %s31, %s32
      %p36 = pneg %p30
      %p37 = scmp.eq.s32.totalorder %s21, 1
      %p38 = por %p36, %p37
      %p39 = scmp.ne.s32.totalorder %s31, %s34
      %p40 = scmp.eq.s32.totalorder %s21, 0
      %p41 = por %p39, %p40
      %p42 = scmp.ne.s32.totalorder %s31, %s34
      %p43 = scmp.eq.s32.totalorder %s26, 1
      %p44 = por %p42, %p43
      %p45 = scmp.ne.s32.totalorder %s34, %s35
      %p46 = scmp.eq.s32.totalorder %s26, 0
      %p47 = por %p45, %p46
      %p48 = scmp.ne.s32.totalorder %s34, %s35
      %p49 = scmp.eq.s32.totalorder %s27, 1
      %p50 = por %p48, %p49
      %p52 = scmp.ne.s32.totalorder %s35, %s51
      %p53 = scmp.eq.s32.totalorder %s27, 0
      %p54 = por %p52, %p53
      %s55 = ssub.s32 %s21, %s28
      %p56 = scmp.eq.s32.totalorder %s55, 0
      %s58 = sadd.s32 %s57, 1
      %s59 = scalar_select %p56, %s57, %s58
      %p62 = pneg %p56
      %p63 = scmp.eq.s32.totalorder %s21, 1
      %p64 = por %p62, %p63
      %p65 = scmp.ne.s32.totalorder %s57, %s60
      %p66 = scmp.eq.s32.totalorder %s21, 0
      %p67 = por %p65, %p66
      %p68 = scmp.ne.s32.totalorder %s57, %s60
      %p69 = scmp.eq.s32.totalorder %s26, 1
      %p70 = por %p68, %p69
      %p71 = scmp.ne.s32.totalorder %s60, %s61
      %p72 = scmp.eq.s32.totalorder %s26, 0
      %p73 = por %p71, %p72
      %p74 = scmp.ne.s32.totalorder %s60, %s61
      %p75 = scmp.eq.s32.totalorder %s27, 1
      %p76 = por %p74, %p75
      %p78 = scmp.ne.s32.totalorder %s61, %s77
      %p79 = scmp.eq.s32.totalorder %s27, 0
      %p80 = por %p78, %p79
      %s81 = ssub.s32 %s21, %s28
      %p82 = scmp.eq.s32.totalorder %s81, 0
      %s84 = sadd.s32 %s83, 1
      %s85 = scalar_select %p82, %s83, %s84
      %p88 = pneg %p82
      %p89 = scmp.eq.s32.totalorder %s21, 1
      %p90 = por %p88, %p89
      %p91 = scmp.ne.s32.totalorder %s83, %s86
      %p92 = scmp.eq.s32.totalorder %s21, 0
      %p93 = por %p91, %p92
      %p94 = scmp.ne.s32.totalorder %s83, %s86
      %p95 = scmp.eq.s32.totalorder %s26, 1
      %p96 = por %p94, %p95
      %p97 = scmp.ne.s32.totalorder %s86, %s87
      %p98 = scmp.eq.s32.totalorder %s26, 0
      %p99 = por %p97, %p98
      %p100 = scmp.ne.s32.totalorder %s86, %s87
      %p101 = scmp.eq.s32.totalorder %s27, 1
      %p102 = por %p100, %p101
      %p104 = scmp.ne.s32.totalorder %s87, %s103
      %p105 = scmp.eq.s32.totalorder %s27, 0
      %p106 = por %p104, %p105
      %s108 = sadd.s32 %s107, 1
      %p111 = scmp.eq.s32.totalorder %s21, 1
      %p112 = scmp.ne.s32.totalorder %s107, %s109
      %p113 = scmp.eq.s32.totalorder %s21, 0
      %p114 = por %p112, %p113
      %p115 = scmp.ne.s32.totalorder %s107, %s109
      %p116 = scmp.eq.s32.totalorder %s26, 1
      %p117 = por %p115, %p116
      %p118 = scmp.ne.s32.totalorder %s109, %s110
      %p119 = scmp.eq.s32.totalorder %s26, 0
      %p120 = por %p118, %p119
      %p121 = scmp.ne.s32.totalorder %s109, %s110
      %p122 = scmp.eq.s32.totalorder %s27, 1
      %p123 = por %p121, %p122
      %p125 = scmp.ne.s32.totalorder %s110, %s124
      %p126 = scmp.eq.s32.totalorder %s27, 0
      %p127 = por %p125, %p126
      %s129 = sadd.s32 %s128, 1
      %p132 = scmp.eq.s32.totalorder %s21, 1
      %p133 = scmp.ne.s32.totalorder %s128, %s130
      %p134 = scmp.eq.s32.totalorder %s21, 0
      %p135 = por %p133, %p134
      %p136 = scmp.ne.s32.totalorder %s128, %s130
      %p137 = scmp.eq.s32.totalorder %s26, 1
      %p138 = por %p136, %p137
      %p139 = scmp.ne.s32.totalorder %s130, %s131
      %p140 = scmp.eq.s32.totalorder %s26, 0
      %p141 = por %p139, %p140
      %p142 = scmp.ne.s32.totalorder %s130, %s131
      %p143 = scmp.eq.s32.totalorder %s27, 1
      %p144 = por %p142, %p143
      %p146 = scmp.ne.s32.totalorder %s131, %s145
      %p147 = scmp.eq.s32.totalorder %s27, 0
      %p148 = por %p146, %p147
      %s150 = sadd.s32 %s149, 1
      %p153 = scmp.eq.s32.totalorder %s21, 1
      %p154 = scmp.ne.s32.totalorder %s149, %s151
      %p155 = scmp.eq.s32.totalorder %s21, 0
      %p156 = por %p154, %p155
      %p157 = scmp.ne.s32.totalorder %s149, %s151
      %p158 = scmp.eq.s32.totalorder %s26, 1
      %p159 = por %p157, %p158
      %p160 = scmp.ne.s32.totalorder %s151, %s152
      %p161 = scmp.eq.s32.totalorder %s26, 0
      %p162 = por %p160, %p161
      %p163 = scmp.ne.s32.totalorder %s151, %s152
      %p164 = scmp.eq.s32.totalorder %s27, 1
      %p165 = por %p163, %p164
      %p167 = scmp.ne.s32.totalorder %s152, %s166
      %p168 = scmp.eq.s32.totalorder %s27, 0
      %p169 = por %p167, %p168
      %s171 = sadd.s32 %s170, 1
      %p174 = scmp.eq.s32.totalorder %s21, 1
      %p175 = scmp.ne.s32.totalorder %s170, %s172
      %p176 = scmp.eq.s32.totalorder %s21, 0
      %p177 = por %p175, %p176
      %p178 = scmp.ne.s32.totalorder %s170, %s172
      %p179 = scmp.eq.s32.totalorder %s26, 1
      %p180 = por %p178, %p179
      %p181 = scmp.ne.s32.totalorder %s172, %s173
      %p182 = scmp.eq.s32.totalorder %s26, 0
      %p183 = por %p181, %p182
      %p184 = scmp.ne.s32.totalorder %s172, %s173
      %p185 = scmp.eq.s32.totalorder %s27, 1
      %p186 = por %p184, %p185
      %p188 = scmp.ne.s32.totalorder %s173, %s187
      %p189 = scmp.eq.s32.totalorder %s27, 0
      %p190 = por %p188, %p189
      %s191 = ssub.s32 %s21, %s28
      %p192 = scmp.eq.s32.totalorder %s191, 0
      %s194 = sadd.s32 %s193, 1
      %s195 = scalar_select %p192, %s193, %s194
      %p198 = pneg %p192
      %p199 = scmp.eq.s32.totalorder %s21, 1
      %p200 = por %p198, %p199
      %p201 = scmp.ne.s32.totalorder %s193, %s196
      %p202 = scmp.eq.s32.totalorder %s21, 0
      %p203 = por %p201, %p202
      %p204 = scmp.ne.s32.totalorder %s193, %s196
      %p205 = scmp.eq.s32.totalorder %s26, 1
      %p206 = por %p204, %p205
      %p207 = scmp.ne.s32.totalorder %s196, %s197
      %p208 = scmp.eq.s32.totalorder %s26, 0
      %p209 = por %p207, %p208
      %p210 = scmp.ne.s32.totalorder %s196, %s197
      %p211 = scmp.eq.s32.totalorder %s27, 1
      %p212 = por %p210, %p211
      %p214 = scmp.ne.s32.totalorder %s197, %s213
      %p215 = scmp.eq.s32.totalorder %s27, 0
      %p216 = por %p214, %p215
      %s217 = ssub.s32 %s21, %s28
      %p218 = scmp.eq.s32.totalorder %s217, 0
      %s220 = sadd.s32 %s219, 1
      %s221 = scalar_select %p218, %s219, %s220
      %p224 = pneg %p218
      %p225 = scmp.eq.s32.totalorder %s21, 1
      %p226 = por %p224, %p225
      %p227 = scmp.ne.s32.totalorder %s219, %s222
      %p228 = scmp.eq.s32.totalorder %s21, 0
      %p229 = por %p227, %p228
      %p230 = scmp.ne.s32.totalorder %s219, %s222
      %p231 = scmp.eq.s32.totalorder %s26, 1
      %p232 = por %p230, %p231
      %p233 = scmp.ne.s32.totalorder %s222, %s223
      %p234 = scmp.eq.s32.totalorder %s26, 0
      %p235 = por %p233, %p234
      %p236 = scmp.ne.s32.totalorder %s222, %s223
      %p237 = scmp.eq.s32.totalorder %s27, 1
      %p238 = por %p236, %p237
      %p240 = scmp.ne.s32.totalorder %s223, %s239
      %p241 = scmp.eq.s32.totalorder %s27, 0
      %p242 = por %p240, %p241
      %p243 = scmp.le.s32.totalorder 1, %s21
      %p244 = scmp.lt.s32.totalorder %s21, 3
      %p245 = pnand %p243, %p244
      %p246 = pneg %p245
      // Predicated region
      $region9: #{tpu_custom_call.1} parent=5 // pred_check
        _
      $region10: #{tpu_custom_call.1} parent=5 // pred_check_branch
        %248 = sbr.rel (%p245) target = $region12
      $region11: #{tpu_custom_call.1} parent=5 // pred_region
        %s249 = ssub.s32 %s21, 1
        // Predicated region
        $region13: #{tpu_custom_call.1} parent=11 // pred_check
          %p250 = pneg %p120
        $region14: #{tpu_custom_call.1} parent=11 // pred_check_branch
          %252 = sbr.rel (%p250) target = $region16
        $region15: #{tpu_custom_call.1} parent=11 // pred_region
          _
        $region16: #{tpu_custom_call.1} parent=11 // pred_fallthru
          _
        // Predicated region
        $region17: #{tpu_custom_call.1} parent=11 // pred_check
          %p253 = pneg %p141
        $region18: #{tpu_custom_call.1} parent=11 // pred_check_branch
          %255 = sbr.rel (%p253) target = $region20
        $region19: #{tpu_custom_call.1} parent=11 // pred_region
          _
        $region20: #{tpu_custom_call.1} parent=11 // pred_fallthru
          _
        // Predicated region
        $region21: #{tpu_custom_call.1} parent=11 // pred_check
          %p256 = pneg %p162
        $region22: #{tpu_custom_call.1} parent=11 // pred_check_branch
          %258 = sbr.rel (%p256) target = $region24
        $region23: #{tpu_custom_call.1} parent=11 // pred_region
          _
        $region24: #{tpu_custom_call.1} parent=11 // pred_fallthru
          _
        // Predicated region
        $region25: #{tpu_custom_call.1} parent=11 // pred_check
          %p259 = pneg %p183
        $region26: #{tpu_custom_call.1} parent=11 // pred_check_branch
          %261 = sbr.rel (%p259) target = $region28
        $region27: #{tpu_custom_call.1} parent=11 // pred_region
          _
        $region28: #{tpu_custom_call.1} parent=11 // pred_fallthru
          _
      $region12: #{tpu_custom_call.1} parent=5 // pred_fallthru
        _
      %p262 = scmp.lt.s32.totalorder %s21, 2
      // Predicated region
      $region29: #{tpu_custom_call.1} parent=5 // pred_check
        %p263 = pneg %p262
      $region30: #{tpu_custom_call.1} parent=5 // pred_check_branch
        %265 = sbr.rel (%p263) target = $region32
      $region31: #{tpu_custom_call.1} parent=5 // pred_region
        // Predicated region
        $region33: #{tpu_custom_call.1} parent=31 // pred_check
          %p266 = pneg %p41
        $region34: #{tpu_custom_call.1} parent=31 // pred_check_branch
          %268 = sbr.rel (%p266) target = $region36
        $region35: #{tpu_custom_call.1} parent=31 // pred_region
          %p269 = scmp.lt.s32.totalorder %s21, 1
          %s270 = scalar_select %p269, %s21, 1
          %s271 = smul.addr %s270, 2
          %s272 = smul.addr %s271, 4
          %s273 = scalar_lea.vmem %s0, %s272
        $region36: #{tpu_custom_call.1} parent=31 // pred_fallthru
          _
        // Predicated region
        $region37: #{tpu_custom_call.1} parent=31 // pred_check
          %p274 = pneg %p67
        $region38: #{tpu_custom_call.1} parent=31 // pred_check_branch
          %276 = sbr.rel (%p274) target = $region40
        $region39: #{tpu_custom_call.1} parent=31 // pred_region
          %p277 = scmp.lt.s32.totalorder %s21, 1
          %s278 = scalar_select %p277, %s21, 1
          %s279 = smul.addr %s278, 2
          %s280 = smul.addr %s279, 4
          %s281 = scalar_lea.vmem %s1, %s280
        $region40: #{tpu_custom_call.1} parent=31 // pred_fallthru
          _
        // Predicated region
        $region41: #{tpu_custom_call.1} parent=31 // pred_check
          %p282 = pneg %p93
        $region42: #{tpu_custom_call.1} parent=31 // pred_check_branch
          %284 = sbr.rel (%p282) target = $region44
        $region43: #{tpu_custom_call.1} parent=31 // pred_region
          %p285 = scmp.lt.s32.totalorder %s21, 1
          %s286 = scalar_select %p285, %s21, 1
          %s287 = scalar_lea.vmem %s2, %s286
        $region44: #{tpu_custom_call.1} parent=31 // pred_fallthru
          _
      $region32: #{tpu_custom_call.1} parent=5 // pred_fallthru
        _
      %p288 = scmp.le.s32.totalorder 1, %s21
      %p289 = scmp.lt.s32.totalorder %s21, 3
      %p290 = pnand %p288, %p289
      %p291 = pneg %p290
      // Predicated region
      $region45: #{tpu_custom_call.1} parent=5 // pred_check
        _
      $region46: #{tpu_custom_call.1} parent=5 // pred_check_branch
        %293 = sbr.rel (%p290) target = $region48
      $region47: #{tpu_custom_call.1} parent=5 // pred_region
        %s294 = ssub.s32 %s21, 1
        %p295 = scmp.lt.s32.totalorder %s26, 1
        %s296 = scalar_select %p295, %s26, 1
        %s297 = smul.addr %s296, 2
        %s298 = smul.addr %s297, 4
        %s299 = scalar_lea.vmem %s0, %s298
        %p300 = pneg %p47
        %p301 = pneg %p44
        %p302 = scmp.lt.s32.totalorder %s26, 1
        %s303 = scalar_select %p302, %s26, 1
        %s304 = smul.addr %s303, 2
        %s305 = smul.addr %s304, 4
        %s306 = scalar_lea.vmem %s1, %s305
        %p307 = pneg %p73
        %p308 = pneg %p70
        %p309 = scmp.lt.s32.totalorder %s26, 1
        %s310 = scalar_select %p309, %s26, 1
        %s311 = scalar_lea.vmem %s2, %s310
        %p312 = pneg %p99
        %p313 = pneg %p96
        %p314 = pneg %p120
        %p315 = pneg %p117
        %p316 = pneg %p141
        %p317 = pneg %p138
        %p318 = pneg %p162
        %p319 = pneg %p159
        %p320 = pneg %p183
        %p321 = pneg %p180
        %p322 = pneg %p209
        %p323 = pneg %p206
        %s324 = sand.u32 %s196, 1
        %s325 = scalar_lea.sflag [#allocation3], %s324
        %s326 = sand.u32 %s196, 1
        %s327 = smul.addr %s326, 8
        %s328 = scalar_lea.vmem [#allocation2], %s327
        %p329 = pneg %p235
        %p330 = pneg %p232
        %s331 = sand.u32 %s222, 1
        %s332 = scalar_lea.sflag [#allocation5], %s331
        %s333 = sand.u32 %s222, 1
        %s334 = smul.addr %s333, 8
        %s335 = scalar_lea.vmem [#allocation4], %s334
        %p336 = scmp.lt.s32.totalorder %s26, 1
        %s337 = scalar_select %p336, %s26, 1
        %s338 = smul.addr %s337, 2
        %s339 = smul.addr %s338, 4
        %s340 = scalar_lea.vmem %s0, %s339
        %p341 = scmp.lt.s32.totalorder %s26, 1
        %s342 = scalar_select %p341, %s26, 1
        %s343 = smul.addr %s342, 2
        %s344 = smul.addr %s343, 4
        %s345 = scalar_lea.vmem %s1, %s344
        %p346 = scmp.lt.s32.totalorder %s26, 1
        %s347 = scalar_select %p346, %s26, 1
        %s348 = scalar_lea.vmem %s2, %s347
        %v350 = vld [vmem:[%s348] sm:$0x1]
        %v351 = vld [vmem:[%s340] sm:$0xff]
        %v352 = vld [vmem:[%s345] sm:$0xff]
        %v354 = vlaneseq
        %v355 = vshrl.u32 %v354, 7
        %v356 = vsub.s32 0, %v355
        %v357 = vrot.slane %v350, %v356
        %358 = vset.pattern.permute.xlu0 0
        %359 = vperm.xlu0 %358, %v357
        %v360 = vpop.permute.xlu0 %359
        %v362 = vmul.f32 %v351, %v360
        %363 = vset.pattern.permute.xlu0 1
        %364 = vperm.xlu0 %363, %v357
        %v365 = vpop.permute.xlu0 %364
        %v367 = vmul.f32 %v352, %v365
        %368 = vset.pattern.permute.xlu0 2
        %369 = vperm.xlu0 %368, %v357
        %v370 = vpop.permute.xlu0 %369
        %v372 = vadd.f32 %v367, %v370
        %v373 = vadd.f32 %v362, %v372
        %374 = vst [vmem:[%s328] sm:$0xff] %v373
        %v376 = vcombine.high %v373, %v373
        %v378 = vpack.c.bf16 %v373, %v373
        %v379 = vpack.c.bf16 %v376, %v376
        %v380 = vld [vmem:[%s4] sm:$0xf]
        %v381 = vld [vmem:[%s4 + $0x4] sm:$0xf]
        %v382 = vld [vmem:[%s4 + $0x8] sm:$0xf]
        %v383 = vld [vmem:[%s4 + $0xc] sm:$0xf]
        %s384 = smul.u32 %s26, 32
        %s385 = scalar_lea.vmem %s3, %s384
        %v386 = vld [vmem:[%s385] sm:$0xff]
        %v387 = vld [vmem:[%s385 + $0x8] sm:$0xff]
        %v388 = vld [vmem:[%s385 + $0x10] sm:$0xff]
        %v389 = vld [vmem:[%s385 + $0x18] sm:$0xff]
        %391 = vset.pattern.permute.xlu0 0
        %392 = vperm.xlu0 %391, %v386
        %v393 = vpop.permute.xlu0 %392
        %396 = vset.pattern.permute.xlu0 0
        %397 = vperm.xlu0 %396, %v387
        %v398 = vpop.permute.xlu0 %397
        %401 = vset.pattern.permute.xlu0 0
        %402 = vperm.xlu0 %401, %v388
        %v403 = vpop.permute.xlu0 %402
        %406 = vset.pattern.permute.xlu0 0
        %407 = vperm.xlu0 %406, %v389
        %v408 = vpop.permute.xlu0 %407
        %v414 = vunpack.c.l.b16 %v380
        %v415 = vunpack.c.l.b16 %v381
        %v416 = vunpack.c.l.b16 %v382
        %v417 = vunpack.c.l.b16 %v383
        %v418 = vpack.c.b16 %v415, %v414
        %v419 = vpack.c.b16 %v417, %v416
        %vm420 = vcmask 31744
        %v422 = vsel %vm420, %v418, 0
        %v425 = vsel %vm420, %v419, 0
        %vm427 = vcmask 1041408
        %v429 = vsel %vm427, %v378, 0
        %v432 = vsel %vm427, %v379, 0
        %434 = vmatprep.subr.bf16.mxu0 %v432
        %435 = vmatpush1.bf16.msra.mxu0 %v429
        %436 = vmatprep.subr.bf16.mxu0 0
        %437 = vmatpush1.bf16.msra.mxu0 0
        %438 = vmatprep.subr.bf16.mxu0 0
        %439 = vmatpush1.bf16.msra.mxu0 0
        %440 = vmatprep.subr.bf16.mxu0 0
        %441 = vmatpush1.bf16.msra.mxu0 0
        %442 = vmatprep.subr.bf16.mxu0 0
        %443 = vmatpush1.bf16.msra.mxu0 0
        %444 = vmatprep.subr.bf16.mxu0 0
        %445 = vmatpush1.bf16.msra.mxu0 0
        %446 = vmatprep.subr.bf16.mxu0 0
        %447 = vmatpush1.bf16.msra.mxu0 0
        %448 = vmatprep.subr.bf16.mxu0 0
        %449 = vmatpush1.bf16.msra.mxu0 0
        %450 = vmatprep.subr.bf16.mxu0 0
        %451 = vmatpush1.bf16.msra.mxu0 0
        %452 = vmatprep.subr.bf16.mxu0 0
        %453 = vmatpush1.bf16.msra.mxu0 0
        %454 = vmatprep.subr.bf16.mxu0 0
        %455 = vmatpush1.bf16.msra.mxu0 0
        %456 = vmatprep.subr.bf16.mxu0 0
        %457 = vmatpush1.bf16.msra.mxu0 0
        %458 = vmatprep.subr.bf16.mxu0 0
        %459 = vmatpush1.bf16.msra.mxu0 0
        %460 = vmatprep.subr.bf16.mxu0 0
        %461 = vmatpush1.bf16.msra.mxu0 0
        %462 = vmatprep.subr.bf16.mxu0 0
        %463 = vmatpush1.bf16.msra.mxu0 0
        %464 = vmatprep.subr.bf16.mxu0 0
        %465 = vmatpush1.bf16.msra.mxu0 0
        %466 = vmatprep.mubr.bf16.mxu0 0
        %467 = vmatmul.mubr.bf16.gmra.mrb[0].mxu0 %v422
        %v468 = vpop.f32.mrb[0].mxu0
        %v469 = vadd.f32 %v393, %v468
        %v470 = vpop.f32.mrb[0].mxu0
        %v471 = vadd.f32 %v393, %v470
        %v472 = vpop.f32.mrb[0].mxu0
        %v473 = vadd.f32 %v398, %v472
        %v474 = vpop.f32.mrb[0].mxu0
        %v475 = vadd.f32 %v398, %v474
        %476 = vmatprep.mubr.bf16.mxu0 0
        %477 = vmatmul.mubr.bf16.gmra.mrb[0].mxu0 %v425
        %v478 = vpop.f32.mrb[0].mxu0
        %v479 = vadd.f32 %v403, %v478
        %v480 = vpop.f32.mrb[0].mxu0
        %v481 = vadd.f32 %v403, %v480
        %v482 = vpop.f32.mrb[0].mxu0
        %v483 = vadd.f32 %v408, %v482
        %v484 = vpop.f32.mrb[0].mxu0
        %v485 = vadd.f32 %v408, %v484
        %486 = vdwg.mxu0
        %v487 = vmax.f32 %v469, 0.0
        %v488 = vmax.f32 %v471, 0.0
        %v489 = vmax.f32 %v473, 0.0
        %v490 = vmax.f32 %v475, 0.0
        %v491 = vmax.f32 %v479, 0.0
        %v492 = vmax.f32 %v481, 0.0
        %v493 = vmax.f32 %v483, 0.0
        %v494 = vmax.f32 %v485, 0.0
        %v495 = vld [vmem:[%s5] sm:$0x3]
        %v496 = vpack.c.bf16 %v489, %v487
        %v497 = vpack.c.bf16 %v490, %v488
        %v498 = vpack.c.bf16 %v493, %v491
        %v499 = vpack.c.bf16 %v494, %v492
        %v500 = vld [vmem:[%s6] sm:$0xf]
        %502 = vset.pattern.permute.xlu0 0
        %503 = vperm.xlu0 %502, %v500
        %v504 = vpop.permute.xlu0 %503
        %vm506 = vcmask 261120
        %v508 = vsel %vm506, %v495, 0
        %510 = vmatprep.subr.bf16.mxu0 %v497
        %511 = vmatpush1.bf16.msra.mxu0 %v496
        %512 = vmatprep.subr.bf16.mxu0 %v499
        %513 = vmatpush1.bf16.msra.mxu0 %v498
        %514 = vmatprep.subr.bf16.mxu0 0
        %515 = vmatpush1.bf16.msra.mxu0 0
        %516 = vmatprep.subr.bf16.mxu0 0
        %517 = vmatpush1.bf16.msra.mxu0 0
        %518 = vmatprep.subr.bf16.mxu0 0
        %519 = vmatpush1.bf16.msra.mxu0 0
        %520 = vmatprep.subr.bf16.mxu0 0
        %521 = vmatpush1.bf16.msra.mxu0 0
        %522 = vmatprep.subr.bf16.mxu0 0
        %523 = vmatpush1.bf16.msra.mxu0 0
        %524 = vmatprep.subr.bf16.mxu0 0
        %525 = vmatpush1.bf16.msra.mxu0 0
        %526 = vmatprep.subr.bf16.mxu0 0
        %527 = vmatpush1.bf16.msra.mxu0 0
        %528 = vmatprep.subr.bf16.mxu0 0
        %529 = vmatpush1.bf16.msra.mxu0 0
        %530 = vmatprep.subr.bf16.mxu0 0
        %531 = vmatpush1.bf16.msra.mxu0 0
        %532 = vmatprep.subr.bf16.mxu0 0
        %533 = vmatpush1.bf16.msra.mxu0 0
        %534 = vmatprep.subr.bf16.mxu0 0
        %535 = vmatpush1.bf16.msra.mxu0 0
        %536 = vmatprep.subr.bf16.mxu0 0
        %537 = vmatpush1.bf16.msra.mxu0 0
        %538 = vmatprep.subr.bf16.mxu0 0
        %539 = vmatpush1.bf16.msra.mxu0 0
        %540 = vmatprep.subr.bf16.mxu0 0
        %541 = vmatpush1.bf16.msra.mxu0 0
        %542 = vmatprep.mubr.bf16.mxu0 0
        %543 = vmatmul.mubr.bf16.gmra.mrb[0].mxu0 %v508
        %v544 = vpop.f32.mrb[0].mxu0
        %v545 = vadd.f32 %v504, %v544
        %v546 = vpop.f32.mrb[0].mxu0
        %v547 = vadd.f32 %v504, %v546
        %v548 = vpop.f32.mrb[0].mxu0
        %v549 = vpop.f32.mrb[0].mxu0
        %550 = vdwg.mxu0
        %v553 = vcombine.low %v545, %v547
        %555 = vst [vmem:[%s335] sm:$0xff] %v553
        %s556 = sand.u32 %s196, 1
        %s557 = scalar_lea.sflag [#allocation3], %s556
        %s558 = sand.u32 %s196, 1
        %s559 = smul.addr %s558, 8
        %s560 = scalar_lea.vmem [#allocation2], %s559
        %s561 = sand.u32 %s222, 1
        %s562 = scalar_lea.sflag [#allocation5], %s561
        %s563 = sand.u32 %s222, 1
        %s564 = smul.addr %s563, 8
        %s565 = scalar_lea.vmem [#allocation4], %s564
        // Predicated region
        $region49: #{tpu_custom_call.1} parent=47 // pred_check
          %p566 = pneg %p206
        $region50: #{tpu_custom_call.1} parent=47 // pred_check_branch
          %568 = sbr.rel (%p566) target = $region52
        $region51: #{tpu_custom_call.1} parent=47 // pred_region
          %s570 = ssub.s32 128, 128
          %571 = vsyncadd %s557, %s570
          %s572 = smul.addr %s26, 2
          %s573 = smul.addr %s572, 64
          %s574 = scalar_lea.hbm %s7, %s573
          %s576 = sshll.u32 %s560, 4
          %s577 = int_to_ptr.vmem [resolvable:$true] %s576
          %579 = dma.vmem_to_hbm [thread:$0]  %s577, 128, %s574, %s557
        $region52: #{tpu_custom_call.1} parent=47 // pred_fallthru
          _
        // Predicated region
        $region53: #{tpu_custom_call.1} parent=47 // pred_check
          %p580 = pneg %p232
        $region54: #{tpu_custom_call.1} parent=47 // pred_check_branch
          %582 = sbr.rel (%p580) target = $region56
        $region55: #{tpu_custom_call.1} parent=47 // pred_region
          %s584 = ssub.s32 128, 128
          %585 = vsyncadd %s562, %s584
          %s586 = smul.addr %s26, 2
          %s587 = smul.addr %s586, 64
          %s588 = scalar_lea.hbm %s8, %s587
          %s590 = sshll.u32 %s565, 4
          %s591 = int_to_ptr.vmem [resolvable:$true] %s590
          %593 = dma.vmem_to_hbm [thread:$0]  %s591, 128, %s588, %s562
        $region56: #{tpu_custom_call.1} parent=47 // pred_fallthru
          _
      $region48: #{tpu_custom_call.1} parent=5 // pred_fallthru
        _
      %p594 = scmp.le.s32.totalorder 2, %s21
      // Predicated region
      $region57: #{tpu_custom_call.1} parent=5 // pred_check
        %p595 = pneg %p594
      $region58: #{tpu_custom_call.1} parent=5 // pred_check_branch
        %597 = sbr.rel (%p595) target = $region60
      $region59: #{tpu_custom_call.1} parent=5 // pred_region
        %s598 = ssub.s32 %s21, 2
        // Predicated region
        $region61: #{tpu_custom_call.1} parent=59 // pred_check
          %p599 = pneg %p212
        $region62: #{tpu_custom_call.1} parent=59 // pred_check_branch
          %601 = sbr.rel (%p599) target = $region64
        $region63: #{tpu_custom_call.1} parent=59 // pred_region
          %s602 = sand.u32 %s197, 1
          %s603 = scalar_lea.sflag [#allocation3], %s602
          %s604 = sand.u32 %s197, 1
          %s605 = smul.addr %s604, 8
          %s606 = scalar_lea.vmem [#allocation2], %s605
          %607 = dma.done %s603, 128
        $region64: #{tpu_custom_call.1} parent=59 // pred_fallthru
          _
        // Predicated region
        $region65: #{tpu_custom_call.1} parent=59 // pred_check
          %p608 = pneg %p238
        $region66: #{tpu_custom_call.1} parent=59 // pred_check_branch
          %610 = sbr.rel (%p608) target = $region68
        $region67: #{tpu_custom_call.1} parent=59 // pred_region
          %s611 = sand.u32 %s223, 1
          %s612 = scalar_lea.sflag [#allocation5], %s611
          %s613 = sand.u32 %s223, 1
          %s614 = smul.addr %s613, 8
          %s615 = scalar_lea.vmem [#allocation4], %s614
          %616 = dma.done %s612, 128
        $region68: #{tpu_custom_call.1} parent=59 // pred_fallthru
          _
      $region60: #{tpu_custom_call.1} parent=5 // pred_fallthru
        _
    $region6: #{tpu_custom_call.1} parent=1 // loop_footer
      %s25 = sadd.s32 1, %s21
    $region7: #{tpu_custom_call.1} parent=1 // loop_footer_branch
      %20 = sbr.rel target = $region3
    $region8: #{tpu_custom_call.1} parent=1 // loop_exit
      _
    %617 = vsyncpa [#allocation3], 1
    %s618 = scalar_lea.sflag [#allocation3], 1
    %619 = vsyncpa %s618, 1
    %620 = vsyncpa [#allocation5], 1
    %s621 = scalar_lea.sflag [#allocation5], 1
    %622 = vsyncpa %s621, 1

</llo_original>
